<compile_context>
chip_gen: v7x
topology: tpu7x:2x2x1
jax: 0.10.0
libtpu: 0.0.40
codegen_flags: <defaults>
</compile_context>

<pallas_src>
import math

import jax
import jax.numpy as jnp
from jax.experimental import pallas as pl
from jax.experimental.pallas import tpu as pltpu

_GELU_C = math.sqrt(2.0 / math.pi)


def _round_up(n: int, m: int) -> int:
    return ((n + m - 1) // m) * m


def _vmem_budget_bytes() -> int:
    """Physical per-core VMEM minus headroom for Mosaic internal scratch."""
    cap = 64 << 20
    try:
        info = pltpu.get_tpu_info()
        c = getattr(info, "vmem_capacity_bytes", None)
        if c:
            cap = int(c)
    except Exception:
        pass
    # v7x: 64 MiB -> ~52 MiB usable; v5e/v6e: 128 MiB -> ~112 MiB usable
    return cap - max(12 << 20, cap // 8)


def _expert_vmem_bytes(tm: int, C: int, H: int) -> int:
    """Scoped-VMEM estimate for one grid step of the expert kernel."""
    x_tile = tm * C * 2                    # bf16 token tile
    g_tile = tm * 4                        # f32 gate column (tm, 1)
    w1 = C * H * 2                         # bf16 W_fc^T
    w2 = H * C * 2                         # bf16 W_proj^T
    b = (H + C) * 4                        # f32 biases
    o_tile = tm * C * 4                    # f32 resident output block
    hidden = tm * H * 4 + tm * H * 2       # f32 GELU intermediate + bf16 copy
    return 2 * (x_tile + g_tile + w1 + w2 + b + o_tile) + hidden


def _pick_tm(N: int, C: int, H: int, budget: int) -> int:
    n8 = _round_up(max(N, 1), 8)
    if n8 <= 128:
        return n8
    # keep >= 2 token tiles so both v7x TensorCores get work on the parallel axis
    cap = max(128, _round_up((n8 + 1) // 2, 8))
    for tm in (1024, 768, 512, 384, 256, 128):
        if tm > n8 or tm > cap:
            continue
        if _expert_vmem_bytes(tm, C, H) + (8 << 20) <= budget:
            return tm
    # TODO(synk): for configs whose W_fc/W_proj double-buffer alone exceeds the
    # per-core VMEM budget, add an inner H-chunk loop instead of shrinking tm.
    return 128


# ---------------------------------------------------------------------------
# Expert FFN kernel: grid = (token_tiles, experts), output resident over experts
# ---------------------------------------------------------------------------
def _expert_kernel(mask_ref, x_ref, g_ref, w1_ref, b1_ref, w2_ref, b2_ref, o_ref):
    i = pl.program_id(0)
    e = pl.program_id(1)
    n_e = pl.num_programs(1)

    @pl.when(e == 0)
    def _init():
        o_ref[...] = jnp.zeros_like(o_ref)

    # Skip both matmuls + GELU when no token of this tile is routed to expert e.
    @pl.when(mask_ref[i * n_e + e] != 0)
    def _compute():
        # c_fc: bf16 MXU matmul, f32 accumulation
        h = jnp.dot(x_ref[...], w1_ref[0],
                    preferred_element_type=jnp.float32) + b1_ref[0]        # (tm, H)
        # tanh-GELU in f32 (EUP tanh)
        h = 0.5 * h * (1.0 + jnp.tanh(_GELU_C * (h + 0.044715 * h * h * h)))
        # c_proj: bf16 MXU matmul, f32 accumulation
        out = jnp.dot(h.astype(jnp.bfloat16), w2_ref[0],
                      preferred_element_type=jnp.float32) + b2_ref[0]      # (tm, C)
        # per-token routing weight of expert e (zero for unrouted/dropped tokens)
        o_ref[...] = o_ref[...] + g_ref[0] * out


def _run_experts(xs, G, w1_t, b1, w2_t, b2, tm, vmem_budget):
    N, C = xs.shape
    E, _, H = w1_t.shape
    n_pad = _round_up(N, tm)
    n_tiles = n_pad // tm

    xs_p = jnp.pad(xs, ((0, n_pad - N), (0, 0))).astype(jnp.bfloat16)
    g_pad = jnp.pad(G.astype(jnp.float32), ((0, n_pad - N), (0, 0)))      # (n_pad, E)
    g_cols = jnp.transpose(g_pad)[:, :, None]                             # (E, n_pad, 1)
    # per-(tile, expert) "any routed token" mask -> SMEM via scalar prefetch
    tile_mask = (g_pad.reshape(n_tiles, tm, E) != 0.0).any(axis=1)
    tile_mask = tile_mask.astype(jnp.int32).reshape(-1)                   # (n_tiles * E,)

    need = _expert_vmem_bytes(tm, C, H)
    vmem_limit = int(min(vmem_budget, max(need + (8 << 20), 32 << 20)))

    y = pl.pallas_call(
        _expert_kernel,
        out_shape=jax.ShapeDtypeStruct((n_pad, C), jnp.float32),
        grid_spec=pltpu.PrefetchScalarGridSpec(
            num_scalar_prefetch=1,
            grid=(n_tiles, E),
            in_specs=[
                pl.BlockSpec((tm, C), lambda i, e, m: (i, 0)),        # x tile (bf16)
                pl.BlockSpec((1, tm, 1), lambda i, e, m: (e, i, 0)),  # gate column
                pl.BlockSpec((1, C, H), lambda i, e, m: (e, 0, 0)),   # W_fc^T
                pl.BlockSpec((1, 1, H), lambda i, e, m: (e, 0, 0)),   # b_fc
                pl.BlockSpec((1, H, C), lambda i, e, m: (e, 0, 0)),   # W_proj^T
                pl.BlockSpec((1, 1, C), lambda i, e, m: (e, 0, 0)),   # b_proj
            ],
            out_specs=pl.BlockSpec((tm, C), lambda i, e, m: (i, 0)),
        ),
        compiler_params=pltpu.CompilerParams(
            dimension_semantics=("parallel", "arbitrary"),
            vmem_limit_bytes=vmem_limit),
    )(tile_mask, xs_p, g_cols, w1_t, b1, w2_t, b2)
    return y[:N]


# ---------------------------------------------------------------------------
# Full GShardMoE forward
# ---------------------------------------------------------------------------
def gshard_moe_forward(x, gate_w, gate_b, w_fc, b_fc, w_proj, b_proj, rnd, *,
                       expert_capacity, w_importance, w_load, lambda_z, w_penalty):
    """x: (B,T,C); gate_w: (E,C); gate_b: (E,); w_fc: (E,4C,C); b_fc: (E,4C);
    w_proj: (E,C,4C); b_proj: (E,C); rnd: (B*T,) uniform draws for the stochastic
    second-expert gate.  Returns (y, auxiliary_loss)."""
    B, T, C = x.shape
    E = gate_w.shape[0]
    H = w_fc.shape[1]
    N = B * T
    xs = x.reshape(N, C).astype(jnp.float32)

    # ---- gating (plain JAX, f32: tiny compute; exact match with reference) ----
    logits = xs @ jnp.asarray(gate_w, jnp.float32).T + jnp.asarray(gate_b, jnp.float32)
    probs = jax.nn.softmax(logits, axis=-1)

    # ---- auxiliary losses ----
    aux = jnp.float32(0.0)
    if w_penalty > 0:
        p = jax.nn.softmax(logits / 1.66, axis=-1)
        penalty_a = jnp.mean(p * (1.0 - p))
        pm = jnp.mean(p, axis=0)
        penalty_b = 1.0 / E - jnp.mean(pm * (1.0 - pm))
        aux = aux + w_penalty * (penalty_a + penalty_b)
    if lambda_z > 0:
        lse = jax.scipy.special.logsumexp(logits, axis=-1)
        aux = aux + lambda_z * jnp.mean(lse ** 2)

    # ---- top-2 routing with capacity + stochastic second-expert gate ----
    top_w, top_e = jax.lax.top_k(probs, 2)
    g1, g2 = top_w[:, 0], top_w[:, 1]
    e1, e2 = top_e[:, 0], top_e[:, 1]
    denom = g1 + g2
    g1n, g2n = g1 / denom, g2 / denom

    oh1 = jax.nn.one_hot(e1, E, dtype=jnp.float32)
    cap1 = (jnp.cumsum(oh1, axis=0) <= expert_capacity).astype(jnp.float32)
    G = g1n[:, None] * oh1 * cap1
    if w_load > 0:
        aux = aux + w_load * E * jnp.sum(jnp.mean(oh1, axis=0) * jnp.mean(probs, axis=0))

    oh2 = jax.nn.one_hot(e2, E, dtype=jnp.float32)
    cap2 = jnp.cumsum(oh2, axis=0) <= expert_capacity
    stoch = (rnd < 2.0 * g2n)[:, None]
    G = G + g2n[:, None] * oh2 * (cap2 & stoch).astype(jnp.float32)
    if w_importance > 0:
        imp = jnp.sum(G, axis=0)
        m = jnp.mean(imp)
        aux = aux + w_importance * jnp.mean((imp - m) ** 2) / (m ** 2)
    # TODO(synk): total_assigment_count / total_dropped_count are stateful no-grad
    # bookkeeping buffers and are not reproduced here.

    # ---- expert FFNs (Pallas kernel, bf16 MXU matmuls, f32 accumulation) ----
    # cast to bf16 *before* transposing so the wrapper-side transpose moves half
    # the bytes (ideally parameters are stored pre-transposed / bf16 upstream).
    w1_t = jnp.transpose(jnp.asarray(w_fc).astype(jnp.bfloat16), (0, 2, 1))    # (E, C, H)
    w2_t = jnp.transpose(jnp.asarray(w_proj).astype(jnp.bfloat16), (0, 2, 1))  # (E, H, C)
    b1 = jnp.asarray(b_fc, jnp.float32).reshape(E, 1, H)
    b2 = jnp.asarray(b_proj, jnp.float32).reshape(E, 1, C)

    budget = _vmem_budget_bytes()
    tm = _pick_tm(N, C, H, budget)
    y = _run_experts(xs, G, w1_t, b1, w2_t, b2, tm, budget)
    return y.reshape(B, T, C).astype(x.dtype), aux


# ---------------------------------------------------------------------------
# Plain-JAX reference mirroring the PyTorch forward exactly (f32 everywhere)
# ---------------------------------------------------------------------------
def _reference(x, gate_w, gate_b, w_fc, b_fc, w_proj, b_proj, rnd, *,
               expert_capacity, w_importance, w_load, lambda_z, w_penalty):
    B, T, C = x.shape
    E = gate_w.shape[0]
    xs = x.reshape(-1, C)
    logits = xs @ gate_w.T + gate_b
    aux = jnp.float32(0.0)
    if w_penalty > 0:
        p = jax.nn.softmax(logits / 1.66, axis=-1)
        pa = jnp.mean(p * (1.0 - p))
        pm = jnp.mean(p, axis=0)
        pb = 1.0 / E - jnp.mean(pm * (1.0 - pm))
        aux = aux + w_penalty * (pa + pb)
    if lambda_z > 0:
        lse = jax.scipy.special.logsumexp(logits, axis=-1)
        aux = aux + lambda_z * jnp.mean(lse ** 2)
    probs = jax.nn.softmax(logits, axis=-1)
    top_w, top_e = jax.lax.top_k(probs, 2)
    g1, g2 = top_w[:, 0], top_w[:, 1]
    e1, e2 = top_e[:, 0], top_e[:, 1]
    g1n, g2n = g1 / (g1 + g2), g2 / (g1 + g2)
    oh1 = jax.nn.one_hot(e1, E, dtype=jnp.float32)
    cap1 = (jnp.cumsum(oh1, axis=0) <= expert_capacity).astype(jnp.float32)
    G = g1n[:, None] * oh1 * cap1
    if w_load > 0:
        aux = aux + w_load * E * jnp.sum(jnp.mean(oh1, axis=0) * jnp.mean(probs, axis=0))
    oh2 = jax.nn.one_hot(e2, E, dtype=jnp.float32)
    cap2 = jnp.cumsum(oh2, axis=0) <= expert_capacity
    stoch = (rnd < 2.0 * g2n)[:, None]
    G = G + g2n[:, None] * oh2 * (cap2 & stoch).astype(jnp.float32)
    if w_importance > 0:
        imp = jnp.sum(G, axis=0)
        m = jnp.mean(imp)
        aux = aux + w_importance * jnp.mean((imp - m) ** 2) / (m ** 2)
    y = jnp.zeros_like(xs)
    for e in range(E):
        h = xs @ w_fc[e].T + b_fc[e]
        h = 0.5 * h * (1.0 + jnp.tanh(_GELU_C * (h + 0.044715 * h ** 3)))
        out = h @ w_proj[e].T + b_proj[e]
        y = y + G[:, e:e + 1] * out
    return y.reshape(B, T, C), aux


if __name__ == "__main__":
    # Small config: B=2, T=8, n_embd=32, n_experts=4, expert_capacity=3, bias=True.
    B, T, C, E = 2, 8, 32, 4
    H = 4 * C
    cfg = dict(expert_capacity=3, w_importance=0.1, w_load=0.1,
               lambda_z=1e-3, w_penalty=1e-2)

    key = jax.random.PRNGKey(0)
    ks = jax.random.split(key, 8)
    x = jax.random.normal(ks[0], (B, T, C), jnp.float32)
    gate_w = jax.random.normal(ks[1], (E, C), jnp.float32) * 0.3
    gate_b = jax.random.normal(ks[2], (E,), jnp.float32) * 0.1
    w_fc = jax.random.normal(ks[3], (E, H, C), jnp.float32) * 0.02
    b_fc = jax.random.normal(ks[4], (E, H), jnp.float32) * 0.02
    w_proj = jax.random.normal(ks[5], (E, C, H), jnp.float32) * 0.02
    b_proj = jax.random.normal(ks[6], (E, C), jnp.float32) * 0.02
    rnd = jax.random.uniform(ks[7], (B * T,), jnp.float32)  # stochastic top-2 gate draws

    y, aux = gshard_moe_forward(x, gate_w, gate_b, w_fc, b_fc, w_proj, b_proj,
                                rnd, **cfg)
    y = jax.block_until_ready(y)
    aux = jax.block_until_ready(aux)

    y_ref, aux_ref = _reference(x, gate_w, gate_b, w_fc, b_fc, w_proj, b_proj,
                                rnd, **cfg)

    assert y.shape == (B, T, C)
    assert jnp.allclose(y, y_ref, atol=1e-2, rtol=1e-2), \
        f"y mismatch: max|d|={float(jnp.max(jnp.abs(y - y_ref)))}"
    assert jnp.allclose(aux, aux_ref, atol=1e-4, rtol=1e-4), \
        f"aux mismatch: {float(aux)} vs {float(aux_ref)}"
    print("KERNEL_OK")
</pallas_src>

<mosaic_0001>
module attributes {stable_mosaic.version = 11 : i64} {
  func.func @_expert_kernel(%arg0: i32, %arg1: i32, %arg2: memref<4xi32, #tpu.memory_space<smem>>, %arg3: memref<16x32xbf16, #tpu.memory_space<vmem>>, %arg4: memref<1x16x1xf32, #tpu.memory_space<vmem>>, %arg5: memref<1x32x128xbf16, #tpu.memory_space<vmem>>, %arg6: memref<1x1x128xf32, #tpu.memory_space<vmem>>, %arg7: memref<1x128x32xbf16, #tpu.memory_space<vmem>>, %arg8: memref<1x1x32xf32, #tpu.memory_space<vmem>>, %arg9: memref<16x32xf32, #tpu.memory_space<vmem>>) attributes {dimension_semantics = [#tpu.dimension_semantics<parallel>, #tpu.dimension_semantics<arbitrary>], iteration_bounds = array<i64: 1, 4>, scalar_prefetch = 1 : i64, scratch_operands = 0 : i64, tpu.core_type = #tpu.core_type<tc>, window_params = [{transform_indices = @transform_0, window_bounds = array<i64: 16, 32>}, {transform_indices = @transform_1, window_bounds = array<i64: 1, 16, 1>}, {transform_indices = @transform_2, window_bounds = array<i64: 1, 32, 128>}, {transform_indices = @transform_3, window_bounds = array<i64: 1, 1, 128>}, {transform_indices = @transform_4, window_bounds = array<i64: 1, 128, 32>}, {transform_indices = @transform_5, window_bounds = array<i64: 1, 1, 32>}, {transform_indices = @transform_6, window_bounds = array<i64: 16, 32>}]} {
    %c0_i32 = arith.constant 0 : i32
    %0 = arith.cmpi eq, %arg1, %c0_i32 : i32
    %1 = arith.extui %0 : i1 to i32
    %c0_i32_0 = arith.constant 0 : i32
    %2 = arith.cmpi ne, %1, %c0_i32_0 : i32
    scf.if %2 {
      %cst = arith.constant 0.000000e+00 : f32
      %10 = vector.broadcast %cst : f32 to vector<16x32xf32>
      %c0 = arith.constant 0 : index
      %c0_3 = arith.constant 0 : index
      %11 = vector.load %arg9[%c0, %c0_3] : memref<16x32xf32, #tpu.memory_space<vmem>>, vector<16x32xf32>
      tpu.vector_store %arg9[%c0, %c0_3], %10 {strides = array<i32>} : memref<16x32xf32, #tpu.memory_space<vmem>>, vector<16x32xf32>,
    } else {
    }
    %c4_i32 = arith.constant 4 : i32
    %3 = arith.muli %arg0, %c4_i32 : i32
    %4 = arith.addi %3, %arg1 : i32
    %5 = arith.index_cast %4 : i32 to index
    %6 = memref.load %arg2[%5] : memref<4xi32, #tpu.memory_space<smem>>
    %c0_i32_1 = arith.constant 0 : i32
    %7 = arith.cmpi ne, %6, %c0_i32_1 : i32
    %8 = arith.extui %7 : i1 to i32
    %c0_i32_2 = arith.constant 0 : i32
    %9 = arith.cmpi ne, %8, %c0_i32_2 : i32
    scf.if %9 {
      %c0 = arith.constant 0 : index
      %c0_3 = arith.constant 0 : index
      %10 = vector.load %arg3[%c0, %c0_3] : memref<16x32xbf16, #tpu.memory_space<vmem>>, vector<16x32xbf16>
      %c0_4 = arith.constant 0 : index
      %c0_5 = arith.constant 0 : index
      %c0_6 = arith.constant 0 : index
      %11 = vector.load %arg5[%c0_4, %c0_5, %c0_6] : memref<1x32x128xbf16, #tpu.memory_space<vmem>>, vector<1x32x128xbf16>
      %12 = vector.shape_cast %11 : vector<1x32x128xbf16> to vector<32x128xbf16>
      %cst = arith.constant dense<0.000000e+00> : vector<16x128xf32>
      %13 = tpu.matmul %10, %12, %cst {dimension_numbers = #tpu.dot_dimension_numbers<[1], [0], [0], [1], [0, 0, 1, 1], [], []>} : vector<16x32xbf16>, vector<32x128xbf16>, vector<16x128xf32> -> vector<16x128xf32>
      %c0_7 = arith.constant 0 : index
      %c0_8 = arith.constant 0 : index
      %c0_9 = arith.constant 0 : index
      %14 = vector.load %arg6[%c0_7, %c0_8, %c0_9] : memref<1x1x128xf32, #tpu.memory_space<vmem>>, vector<1x1x128xf32>
      %15 = vector.shape_cast %14 : vector<1x1x128xf32> to vector<1x128xf32>
      %16 = vector.broadcast %15 : vector<1x128xf32> to vector<16x128xf32>
      %17 = arith.addf %13, %16 : vector<16x128xf32>
      %cst_10 = arith.constant 5.000000e-01 : f32
      %18 = vector.broadcast %cst_10 : f32 to vector<16x128xf32>
      %19 = arith.mulf %18, %17 : vector<16x128xf32>
      %cst_11 = arith.constant 4.471500e-02 : f32
      %20 = vector.broadcast %cst_11 : f32 to vector<16x128xf32>
      %21 = arith.mulf %20, %17 : vector<16x128xf32>
      %22 = arith.mulf %21, %17 : vector<16x128xf32>
      %23 = arith.mulf %22, %17 : vector<16x128xf32>
      %24 = arith.addf %17, %23 : vector<16x128xf32>
      %cst_12 = arith.constant 0.797884583 : f32
      %25 = vector.broadcast %cst_12 : f32 to vector<16x128xf32>
      %26 = arith.mulf %25, %24 : vector<16x128xf32>
      %27 = math.tanh %26 : vector<16x128xf32>
      %cst_13 = arith.constant 1.000000e+00 : f32
      %28 = vector.broadcast %cst_13 : f32 to vector<16x128xf32>
      %29 = arith.addf %28, %27 : vector<16x128xf32>
      %30 = arith.mulf %19, %29 : vector<16x128xf32>
      %31 = arith.truncf %30 : vector<16x128xf32> to vector<16x128xbf16>
      %c0_14 = arith.constant 0 : index
      %c0_15 = arith.constant 0 : index
      %c0_16 = arith.constant 0 : index
      %32 = vector.load %arg7[%c0_14, %c0_15, %c0_16] : memref<1x128x32xbf16, #tpu.memory_space<vmem>>, vector<1x128x32xbf16>
      %33 = vector.shape_cast %32 : vector<1x128x32xbf16> to vector<128x32xbf16>
      %cst_17 = arith.constant dense<0.000000e+00> : vector<16x32xf32>
      %34 = tpu.matmul %31, %33, %cst_17 {dimension_numbers = #tpu.dot_dimension_numbers<[1], [0], [0], [1], [0, 0, 1, 1], [], []>} : vector<16x128xbf16>, vector<128x32xbf16>, vector<16x32xf32> -> vector<16x32xf32>
      %c0_18 = arith.constant 0 : index
      %c0_19 = arith.constant 0 : index
      %c0_20 = arith.constant 0 : index
      %35 = vector.load %arg8[%c0_18, %c0_19, %c0_20] : memref<1x1x32xf32, #tpu.memory_space<vmem>>, vector<1x1x32xf32>
      %36 = vector.shape_cast %35 : vector<1x1x32xf32> to vector<1x32xf32>
      %37 = vector.broadcast %36 : vector<1x32xf32> to vector<16x32xf32>
      %38 = arith.addf %34, %37 : vector<16x32xf32>
      %c0_21 = arith.constant 0 : index
      %c0_22 = arith.constant 0 : index
      %39 = vector.load %arg9[%c0_21, %c0_22] : memref<16x32xf32, #tpu.memory_space<vmem>>, vector<16x32xf32>
      %c0_23 = arith.constant 0 : index
      %c0_24 = arith.constant 0 : index
      %c0_25 = arith.constant 0 : index
      %40 = vector.load %arg4[%c0_23, %c0_24, %c0_25] : memref<1x16x1xf32, #tpu.memory_space<vmem>>, vector<1x16x1xf32>
      %41 = vector.shape_cast %40 : vector<1x16x1xf32> to vector<16x1xf32>
      %42 = vector.broadcast %41 : vector<16x1xf32> to vector<16x32xf32>
      %43 = arith.mulf %42, %38 : vector<16x32xf32>
      %44 = arith.addf %39, %43 : vector<16x32xf32>
      %c0_26 = arith.constant 0 : index
      %c0_27 = arith.constant 0 : index
      %45 = vector.load %arg9[%c0_26, %c0_27] : memref<16x32xf32, #tpu.memory_space<vmem>>, vector<16x32xf32>
      tpu.vector_store %arg9[%c0_26, %c0_27], %44 {strides = array<i32>} : memref<16x32xf32, #tpu.memory_space<vmem>>, vector<16x32xf32>,
    } else {
    }
    return
  }
  func.func @transform_0(%arg0: i32, %arg1: i32, %arg2: memref<4xi32, #tpu.memory_space<smem>>) -> (i32, i32) {
    %c0_i32 = arith.constant 0 : i32
    %c0_i32_0 = arith.constant 0 : i32
    return %arg0, %c0_i32 : i32, i32
  }
  func.func @transform_1(%arg0: i32, %arg1: i32, %arg2: memref<4xi32, #tpu.memory_space<smem>>) -> (i32, i32, i32) {
    %c0_i32 = arith.constant 0 : i32
    %c0_i32_0 = arith.constant 0 : i32
    return %arg1, %arg0, %c0_i32 : i32, i32, i32
  }
  func.func @transform_2(%arg0: i32, %arg1: i32, %arg2: memref<4xi32, #tpu.memory_space<smem>>) -> (i32, i32, i32) {
    %c0_i32 = arith.constant 0 : i32
    %c0_i32_0 = arith.constant 0 : i32
    %c0_i32_1 = arith.constant 0 : i32
    return %arg1, %c0_i32, %c0_i32_0 : i32, i32, i32
  }
  func.func @transform_3(%arg0: i32, %arg1: i32, %arg2: memref<4xi32, #tpu.memory_space<smem>>) -> (i32, i32, i32) {
    %c0_i32 = arith.constant 0 : i32
    %c0_i32_0 = arith.constant 0 : i32
    %c0_i32_1 = arith.constant 0 : i32
    return %arg1, %c0_i32, %c0_i32_0 : i32, i32, i32
  }
  func.func @transform_4(%arg0: i32, %arg1: i32, %arg2: memref<4xi32, #tpu.memory_space<smem>>) -> (i32, i32, i32) {
    %c0_i32 = arith.constant 0 : i32
    %c0_i32_0 = arith.constant 0 : i32
    %c0_i32_1 = arith.constant 0 : i32
    return %arg1, %c0_i32, %c0_i32_0 : i32, i32, i32
  }
  func.func @transform_5(%arg0: i32, %arg1: i32, %arg2: memref<4xi32, #tpu.memory_space<smem>>) -> (i32, i32, i32) {
    %c0_i32 = arith.constant 0 : i32
    %c0_i32_0 = arith.constant 0 : i32
    %c0_i32_1 = arith.constant 0 : i32
    return %arg1, %c0_i32, %c0_i32_0 : i32, i32, i32
  }
  func.func @transform_6(%arg0: i32, %arg1: i32, %arg2: memref<4xi32, #tpu.memory_space<smem>>) -> (i32, i32) {
    %c0_i32 = arith.constant 0 : i32
    %c0_i32_0 = arith.constant 0 : i32
    return %arg0, %c0_i32 : i32, i32
  }
}

</mosaic_0001>

<llo_original>
// kernel: tpu_custom_call.1
$region0: #{tpu_custom_call.1}
  #allocation0 [shape = 'u32[]', space=smem, size = 0x4, offset = 0x4, fixed_abs, tag = 'smem constant byte address 0x4 - core index']
  #allocation1 [shape = 'u32[144,128]{1,0:T(1,128)}', space=vmem, size = 0x12000, scoped, tag = 'internal scratch']
  #allocation2 [shape = 's32[1]{0}', space=sflag, size = 0x4, scoped, tag = 'scoped memory for tpu_custom_call.1']
  #allocation3 [shape = 'u8[512]{0}', space=smem, size = 0x200, scoped, tag = 'prefetched SMEM operand 0']
  %s0 = inlined_call_operand.vmem [shape: s32[4], index: 0, kind: input, shape index: {}]
  %s1 = inlined_call_operand.vmem [shape: bf16[16,32], index: 1, kind: input, shape index: {}]
  %s2 = inlined_call_operand.vmem [shape: f32[4,16,1], index: 2, kind: input, shape index: {}]
  %s3 = inlined_call_operand.vmem [shape: bf16[4,32,128], index: 3, kind: input, shape index: {}]
  %s4 = inlined_call_operand.vmem [shape: f32[4,1,128], index: 4, kind: input, shape index: {}]
  %s5 = inlined_call_operand.vmem [shape: bf16[4,128,32], index: 5, kind: input, shape index: {}]
  %s6 = inlined_call_operand.vmem [shape: f32[4,1,32], index: 6, kind: input, shape index: {}]
  %s7 = inlined_call_operand.hbm [shape: f32[16,32], index: 7, kind: output, shape index: {}]
  %s8 = sld [smem:[#allocation0]]
  $region65: #{tpu_custom_call.1} parent=0
    _
  %s10 = ssub.s32 1, %s8
  %s11 = scalar_select 0, %s10, %s8
  %s12 = sshll.u32 %s0, 4
  %s13 = int_to_ptr.vmem [resolvable:$true] %s12
  %15 = dma.vmem_to_smem %s13, 16, [#allocation3], [#allocation2]
  %16 = dma.done [#allocation2], 16
  %17 = sfence
  $region1: #{tpu_custom_call.1} parent=0
    #allocation4 [shape = 'u8[8192]{0}', space=vmem, size = 0x2000, scoped, tag = 'output window, operand 0, single buffered']
    #allocation5 [shape = 's32[2]{0}', space=sflag, size = 0x8, scoped, tag = 'scoped memory for tpu_custom_call.1']
    %18 = vsyncpa [#allocation5], 0
    loop: start=0, step=1, limit=6
    $region2: #{tpu_custom_call.1} parent=1 // loop_pre_header
      _
    $region3: #{tpu_custom_call.1} parent=1 // loop_header
      %s20 = sphi 0, %s24
      %p21 = scmp.ge.s32.totalorder %s20, 6
      %s27 = sphi 0, %s39
      %s28 = sphi 0, %s35
      %s29 = sphi 0, %s27
      %s30 = sphi 0, %s28
      %s31 = sphi 0, %s29
      %s32 = sphi 0, %s30
      %s42 = sphi 0, %s44
      %s45 = sphi 0, %s42
      %s46 = sphi 0, %s45
      %s62 = sphi 0, %s46
      %s70 = sphi 0, %s72
      %s73 = sphi 0, %s70
      %s74 = sphi 0, %s73
      %s90 = sphi 0, %s74
      %s96 = sphi 0, %s98
      %s99 = sphi 0, %s96
      %s100 = sphi 0, %s99
      %s116 = sphi 0, %s100
      %s122 = sphi 0, %s124
      %s125 = sphi 0, %s122
      %s126 = sphi 0, %s125
      %s142 = sphi 0, %s126
      %s148 = sphi 0, %s150
      %s151 = sphi 0, %s148
      %s152 = sphi 0, %s151
      %s168 = sphi 0, %s152
      %s174 = sphi 0, %s176
      %s177 = sphi 0, %s174
      %s178 = sphi 0, %s177
      %s194 = sphi 0, %s178
      %s200 = sphi 0, %s202
      %s203 = sphi 0, %s200
      %s204 = sphi 0, %s203
      %s220 = sphi 0, %s204
    $region4: #{tpu_custom_call.1} parent=1 // loop_header_branch
      %23 = sbr.rel (%p21) target = $region8
    $region5: #{tpu_custom_call.1} parent=1 // loop_body
      %s25 = ssub.s32 %s20, 1
      %s26 = ssub.s32 %s20, 2
      %s33 = sadd.s32 1, %s28
      %p34 = scmp.ge.s32.totalorder %s33, 4
      %s35 = scalar_select %p34, 0, %s33
      %s36 = sadd.s32 1, %s27
      %s37 = scalar_select %p34, %s36, %s27
      %p38 = scmp.ge.s32.totalorder %s37, 1
      %s39 = scalar_select %p38, 0, %s37
      %s40 = ssub.s32 %s27, %s39
      %p41 = scmp.eq.s32.totalorder %s40, 0
      %s43 = sadd.s32 %s42, 1
      %s44 = scalar_select %p41, %s42, %s43
      %p47 = pneg %p41
      %p48 = scmp.eq.s32.totalorder %s20, 3
      %p49 = por %p47, %p48
      %p50 = scmp.ne.s32.totalorder %s42, %s45
      %p51 = scmp.eq.s32.totalorder %s20, 0
      %p52 = por %p50, %p51
      %p53 = scmp.ne.s32.totalorder %s42, %s45
      %p54 = scmp.eq.s32.totalorder %s25, 3
      %p55 = por %p53, %p54
      %p56 = scmp.ne.s32.totalorder %s45, %s46
      %p57 = scmp.eq.s32.totalorder %s25, 0
      %p58 = por %p56, %p57
      %p59 = scmp.ne.s32.totalorder %s45, %s46
      %p60 = scmp.eq.s32.totalorder %s26, 3
      %p61 = por %p59, %p60
      %p63 = scmp.ne.s32.totalorder %s46, %s62
      %p64 = scmp.eq.s32.totalorder %s26, 0
      %p65 = por %p63, %p64
      %s66 = ssub.s32 %s28, %s35
      %s67 = ssub.s32 %s27, %s39
      %s68 = sor.u32 %s66, %s67
      %p69 = scmp.eq.s32.totalorder %s68, 0
      %s71 = sadd.s32 %s70, 1
      %s72 = scalar_select %p69, %s70, %s71
      %p75 = pneg %p69
      %p76 = scmp.eq.s32.totalorder %s20, 3
      %p77 = por %p75, %p76
      %p78 = scmp.ne.s32.totalorder %s70, %s73
      %p79 = scmp.eq.s32.totalorder %s20, 0
      %p80 = por %p78, %p79
      %p81 = scmp.ne.s32.totalorder %s70, %s73
      %p82 = scmp.eq.s32.totalorder %s25, 3
      %p83 = por %p81, %p82
      %p84 = scmp.ne.s32.totalorder %s73, %s74
      %p85 = scmp.eq.s32.totalorder %s25, 0
      %p86 = por %p84, %p85
      %p87 = scmp.ne.s32.totalorder %s73, %s74
      %p88 = scmp.eq.s32.totalorder %s26, 3
      %p89 = por %p87, %p88
      %p91 = scmp.ne.s32.totalorder %s74, %s90
      %p92 = scmp.eq.s32.totalorder %s26, 0
      %p93 = por %p91, %p92
      %s94 = ssub.s32 %s28, %s35
      %p95 = scmp.eq.s32.totalorder %s94, 0
      %s97 = sadd.s32 %s96, 1
      %s98 = scalar_select %p95, %s96, %s97
      %p101 = pneg %p95
      %p102 = scmp.eq.s32.totalorder %s20, 3
      %p103 = por %p101, %p102
      %p104 = scmp.ne.s32.totalorder %s96, %s99
      %p105 = scmp.eq.s32.totalorder %s20, 0
      %p106 = por %p104, %p105
      %p107 = scmp.ne.s32.totalorder %s96, %s99
      %p108 = scmp.eq.s32.totalorder %s25, 3
      %p109 = por %p107, %p108
      %p110 = scmp.ne.s32.totalorder %s99, %s100
      %p111 = scmp.eq.s32.totalorder %s25, 0
      %p112 = por %p110, %p111
      %p113 = scmp.ne.s32.totalorder %s99, %s100
      %p114 = scmp.eq.s32.totalorder %s26, 3
      %p115 = por %p113, %p114
      %p117 = scmp.ne.s32.totalorder %s100, %s116
      %p118 = scmp.eq.s32.totalorder %s26, 0
      %p119 = por %p117, %p118
      %s120 = ssub.s32 %s28, %s35
      %p121 = scmp.eq.s32.totalorder %s120, 0
      %s123 = sadd.s32 %s122, 1
      %s124 = scalar_select %p121, %s122, %s123
      %p127 = pneg %p121
      %p128 = scmp.eq.s32.totalorder %s20, 3
      %p129 = por %p127, %p128
      %p130 = scmp.ne.s32.totalorder %s122, %s125
      %p131 = scmp.eq.s32.totalorder %s20, 0
      %p132 = por %p130, %p131
      %p133 = scmp.ne.s32.totalorder %s122, %s125
      %p134 = scmp.eq.s32.totalorder %s25, 3
      %p135 = por %p133, %p134
      %p136 = scmp.ne.s32.totalorder %s125, %s126
      %p137 = scmp.eq.s32.totalorder %s25, 0
      %p138 = por %p136, %p137
      %p139 = scmp.ne.s32.totalorder %s125, %s126
      %p140 = scmp.eq.s32.totalorder %s26, 3
      %p141 = por %p139, %p140
      %p143 = scmp.ne.s32.totalorder %s126, %s142
      %p144 = scmp.eq.s32.totalorder %s26, 0
      %p145 = por %p143, %p144
      %s146 = ssub.s32 %s28, %s35
      %p147 = scmp.eq.s32.totalorder %s146, 0
      %s149 = sadd.s32 %s148, 1
      %s150 = scalar_select %p147, %s148, %s149
      %p153 = pneg %p147
      %p154 = scmp.eq.s32.totalorder %s20, 3
      %p155 = por %p153, %p154
      %p156 = scmp.ne.s32.totalorder %s148, %s151
      %p157 = scmp.eq.s32.totalorder %s20, 0
      %p158 = por %p156, %p157
      %p159 = scmp.ne.s32.totalorder %s148, %s151
      %p160 = scmp.eq.s32.totalorder %s25, 3
      %p161 = por %p159, %p160
      %p162 = scmp.ne.s32.totalorder %s151, %s152
      %p163 = scmp.eq.s32.totalorder %s25, 0
      %p164 = por %p162, %p163
      %p165 = scmp.ne.s32.totalorder %s151, %s152
      %p166 = scmp.eq.s32.totalorder %s26, 3
      %p167 = por %p165, %p166
      %p169 = scmp.ne.s32.totalorder %s152, %s168
      %p170 = scmp.eq.s32.totalorder %s26, 0
      %p171 = por %p169, %p170
      %s172 = ssub.s32 %s28, %s35
      %p173 = scmp.eq.s32.totalorder %s172, 0
      %s175 = sadd.s32 %s174, 1
      %s176 = scalar_select %p173, %s174, %s175
      %p179 = pneg %p173
      %p180 = scmp.eq.s32.totalorder %s20, 3
      %p181 = por %p179, %p180
      %p182 = scmp.ne.s32.totalorder %s174, %s177
      %p183 = scmp.eq.s32.totalorder %s20, 0
      %p184 = por %p182, %p183
      %p185 = scmp.ne.s32.totalorder %s174, %s177
      %p186 = scmp.eq.s32.totalorder %s25, 3
      %p187 = por %p185, %p186
      %p188 = scmp.ne.s32.totalorder %s177, %s178
      %p189 = scmp.eq.s32.totalorder %s25, 0
      %p190 = por %p188, %p189
      %p191 = scmp.ne.s32.totalorder %s177, %s178
      %p192 = scmp.eq.s32.totalorder %s26, 3
      %p193 = por %p191, %p192
      %p195 = scmp.ne.s32.totalorder %s178, %s194
      %p196 = scmp.eq.s32.totalorder %s26, 0
      %p197 = por %p195, %p196
      %s198 = ssub.s32 %s27, %s39
      %p199 = scmp.eq.s32.totalorder %s198, 0
      %s201 = sadd.s32 %s200, 1
      %s202 = scalar_select %p199, %s200, %s201
      %p205 = pneg %p199
      %p206 = scmp.eq.s32.totalorder %s20, 3
      %p207 = por %p205, %p206
      %p208 = scmp.ne.s32.totalorder %s200, %s203
      %p209 = scmp.eq.s32.totalorder %s20, 0
      %p210 = por %p208, %p209
      %p211 = scmp.ne.s32.totalorder %s200, %s203
      %p212 = scmp.eq.s32.totalorder %s25, 3
      %p213 = por %p211, %p212
      %p214 = scmp.ne.s32.totalorder %s203, %s204
      %p215 = scmp.eq.s32.totalorder %s25, 0
      %p216 = por %p214, %p215
      %p217 = scmp.ne.s32.totalorder %s203, %s204
      %p218 = scmp.eq.s32.totalorder %s26, 3
      %p219 = por %p217, %p218
      %p221 = scmp.ne.s32.totalorder %s204, %s220
      %p222 = scmp.eq.s32.totalorder %s26, 0
      %p223 = por %p221, %p222
      %p224 = scmp.le.s32.totalorder 1, %s20
      %p225 = scmp.lt.s32.totalorder %s20, 5
      %p226 = pnand %p224, %p225
      %p227 = pneg %p226
      // Predicated region
      $region9: #{tpu_custom_call.1} parent=5 // pred_check
        _
      $region10: #{tpu_custom_call.1} parent=5 // pred_check_branch
        %229 = sbr.rel (%p226) target = $region12
      $region11: #{tpu_custom_call.1} parent=5 // pred_region
        %s230 = ssub.s32 %s20, 1
        // Predicated region
        $region13: #{tpu_custom_call.1} parent=11 // pred_check
          %p231 = pneg %p58
        $region14: #{tpu_custom_call.1} parent=11 // pred_check_branch
          %233 = sbr.rel (%p231) target = $region16
        $region15: #{tpu_custom_call.1} parent=11 // pred_region
          %s234 = smul.u32 2, %s29
          %p235 = scmp.lt.s32.totalorder %s234, 1
          %s236 = scalar_select %p235, %s234, 1
          %s237 = smul.addr %s236, 4
          %s238 = scalar_lea.vmem %s1, %s237
          %s239 = smul.u32 2, %s29
        $region16: #{tpu_custom_call.1} parent=11 // pred_fallthru
          _
      $region12: #{tpu_custom_call.1} parent=5 // pred_fallthru
        _
      %p240 = scmp.lt.s32.totalorder %s20, 4
      // Predicated region
      $region17: #{tpu_custom_call.1} parent=5 // pred_check
        %p241 = pneg %p240
      $region18: #{tpu_custom_call.1} parent=5 // pred_check_branch
        %243 = sbr.rel (%p241) target = $region20
      $region19: #{tpu_custom_call.1} parent=5 // pred_region
        // Predicated region
        $region21: #{tpu_custom_call.1} parent=19 // pred_check
          %p244 = pneg %p80
        $region22: #{tpu_custom_call.1} parent=19 // pred_check_branch
          %246 = sbr.rel (%p244) target = $region24
        $region23: #{tpu_custom_call.1} parent=19 // pred_region
          %s247 = smul.u32 2, %s27
          %p248 = scmp.lt.s32.totalorder %s28, 3
          %s249 = scalar_select %p248, %s28, 3
          %p250 = scmp.lt.s32.totalorder %s247, 1
          %s251 = scalar_select %p250, %s247, 1
          %s252 = smul.addr %s249, 2
          %s253 = sadd.s32 %s251, %s252
          %s254 = smul.addr %s253, 8
          %s255 = scalar_lea.vmem %s2, %s254
          %s256 = smul.u32 2, %s27
        $region24: #{tpu_custom_call.1} parent=19 // pred_fallthru
          _
        // Predicated region
        $region25: #{tpu_custom_call.1} parent=19 // pred_check
          %p257 = pneg %p106
        $region26: #{tpu_custom_call.1} parent=19 // pred_check_branch
          %259 = sbr.rel (%p257) target = $region28
        $region27: #{tpu_custom_call.1} parent=19 // pred_region
          %p260 = scmp.lt.s32.totalorder %s28, 3
          %s261 = scalar_select %p260, %s28, 3
          %s262 = smul.addr %s261, 4
          %s263 = smul.addr %s262, 4
          %s264 = scalar_lea.vmem %s3, %s263
        $region28: #{tpu_custom_call.1} parent=19 // pred_fallthru
          _
        // Predicated region
        $region29: #{tpu_custom_call.1} parent=19 // pred_check
          %p265 = pneg %p132
        $region30: #{tpu_custom_call.1} parent=19 // pred_check_branch
          %267 = sbr.rel (%p265) target = $region32
        $region31: #{tpu_custom_call.1} parent=19 // pred_region
          %p268 = scmp.lt.s32.totalorder %s28, 3
          %s269 = scalar_select %p268, %s28, 3
          %s270 = scalar_lea.vmem %s4, %s269
        $region32: #{tpu_custom_call.1} parent=19 // pred_fallthru
          _
        // Predicated region
        $region33: #{tpu_custom_call.1} parent=19 // pred_check
          %p271 = pneg %p158
        $region34: #{tpu_custom_call.1} parent=19 // pred_check_branch
          %273 = sbr.rel (%p271) target = $region36
        $region35: #{tpu_custom_call.1} parent=19 // pred_region
          %p274 = scmp.lt.s32.totalorder %s28, 3
          %s275 = scalar_select %p274, %s28, 3
          %s276 = smul.addr %s275, 16
          %s277 = smul.addr %s276, 4
          %s278 = scalar_lea.vmem %s5, %s277
        $region36: #{tpu_custom_call.1} parent=19 // pred_fallthru
          _
        // Predicated region
        $region37: #{tpu_custom_call.1} parent=19 // pred_check
          %p279 = pneg %p184
        $region38: #{tpu_custom_call.1} parent=19 // pred_check_branch
          %281 = sbr.rel (%p279) target = $region40
        $region39: #{tpu_custom_call.1} parent=19 // pred_region
          %p282 = scmp.lt.s32.totalorder %s28, 3
          %s283 = scalar_select %p282, %s28, 3
          %s284 = scalar_lea.vmem %s6, %s283
        $region40: #{tpu_custom_call.1} parent=19 // pred_fallthru
          _
      $region20: #{tpu_custom_call.1} parent=5 // pred_fallthru
        _
      %p285 = scmp.le.s32.totalorder 1, %s20
      %p286 = scmp.lt.s32.totalorder %s20, 5
      %p287 = pnand %p285, %p286
      %p288 = pneg %p287
      // Predicated region
      $region41: #{tpu_custom_call.1} parent=5 // pred_check
        _
      $region42: #{tpu_custom_call.1} parent=5 // pred_check_branch
        %290 = sbr.rel (%p287) target = $region44
      $region43: #{tpu_custom_call.1} parent=5 // pred_region
        %s291 = ssub.s32 %s20, 1
        %s292 = smul.u32 2, %s29
        %p293 = scmp.lt.s32.totalorder %s292, 1
        %s294 = scalar_select %p293, %s292, 1
        %s295 = smul.addr %s294, 4
        %s296 = scalar_lea.vmem %s1, %s295
        %p297 = pneg %p58
        %p298 = pneg %p55
        %s299 = smul.u32 2, %s29
        %p300 = scmp.lt.s32.totalorder %s30, 3
        %s301 = scalar_select %p300, %s30, 3
        %p302 = scmp.lt.s32.totalorder %s299, 1
        %s303 = scalar_select %p302, %s299, 1
        %s304 = smul.addr %s301, 2
        %s305 = sadd.s32 %s303, %s304
        %s306 = smul.addr %s305, 8
        %s307 = scalar_lea.vmem %s2, %s306
        %p308 = pneg %p86
        %p309 = pneg %p83
        %p310 = scmp.lt.s32.totalorder %s30, 3
        %s311 = scalar_select %p310, %s30, 3
        %s312 = smul.addr %s311, 4
        %s313 = smul.addr %s312, 4
        %s314 = scalar_lea.vmem %s3, %s313
        %p315 = pneg %p112
        %p316 = pneg %p109
        %p317 = scmp.lt.s32.totalorder %s30, 3
        %s318 = scalar_select %p317, %s30, 3
        %s319 = scalar_lea.vmem %s4, %s318
        %p320 = pneg %p138
        %p321 = pneg %p135
        %p322 = scmp.lt.s32.totalorder %s30, 3
        %s323 = scalar_select %p322, %s30, 3
        %s324 = smul.addr %s323, 16
        %s325 = smul.addr %s324, 4
        %s326 = scalar_lea.vmem %s5, %s325
        %p327 = pneg %p164
        %p328 = pneg %p161
        %p329 = scmp.lt.s32.totalorder %s30, 3
        %s330 = scalar_select %p329, %s30, 3
        %s331 = scalar_lea.vmem %s6, %s330
        %p332 = pneg %p190
        %p333 = pneg %p187
        %p334 = pneg %p216
        %p335 = pneg %p213
        %s336 = smul.u32 2, %s29
        %p337 = scmp.lt.s32.totalorder %s336, 1
        %s338 = scalar_select %p337, %s336, 1
        %s339 = smul.addr %s338, 4
        %s340 = scalar_lea.vmem %s1, %s339
        %s341 = smul.u32 2, %s29
        %s342 = smul.u32 2, %s29
        %p343 = scmp.lt.s32.totalorder %s30, 3
        %s344 = scalar_select %p343, %s30, 3
        %p345 = scmp.lt.s32.totalorder %s342, 1
        %s346 = scalar_select %p345, %s342, 1
        %s347 = smul.addr %s344, 2
        %s348 = sadd.s32 %s346, %s347
        %s349 = smul.addr %s348, 8
        %s350 = scalar_lea.vmem %s2, %s349
        %s351 = smul.u32 2, %s29
        %p352 = scmp.lt.s32.totalorder %s30, 3
        %s353 = scalar_select %p352, %s30, 3
        %s354 = smul.addr %s353, 4
        %s355 = smul.addr %s354, 4
        %s356 = scalar_lea.vmem %s3, %s355
        %p357 = scmp.lt.s32.totalorder %s30, 3
        %s358 = scalar_select %p357, %s30, 3
        %s359 = scalar_lea.vmem %s4, %s358
        %p360 = scmp.lt.s32.totalorder %s30, 3
        %s361 = scalar_select %p360, %s30, 3
        %s362 = smul.addr %s361, 16
        %s363 = smul.addr %s362, 4
        %s364 = scalar_lea.vmem %s5, %s363
        %p365 = scmp.lt.s32.totalorder %s30, 3
        %s366 = scalar_select %p365, %s30, 3
        %s367 = scalar_lea.vmem %s6, %s366
        %s368 = smul.u32 2, %s29
        %p370 = scmp.eq.s32.totalorder %s30, 0
        // Predicated region
        $region45: #{tpu_custom_call.1} parent=43 // pred_check
          %p371 = pneg %p370
        $region46: #{tpu_custom_call.1} parent=43 // pred_check_branch
          %373 = sbr.rel (%p371) target = $region48
        $region47: #{tpu_custom_call.1} parent=43 // pred_region
          %vm374 = vcmask 261120
          %375 = vst.msk [vmem:[#allocation4] sm:$0xff] %vm374, 0.0
          %376 = vst.msk [vmem:[#allocation4 + $0x8] sm:$0xff] %vm374, 0.0
        $region48: #{tpu_custom_call.1} parent=43 // pred_fallthru
          _
        %s377 = smul.u32 %s29, 4
        %s378 = sadd.s32 %s377, %s30
        %s379 = sld [smem:[#allocation3 + %s378]]
        %p380 = scmp.ne.s32.totalorder %s379, 0
        // Predicated region
        $region49: #{tpu_custom_call.1} parent=43 // pred_check
          %p381 = pneg %p380
        $region50: #{tpu_custom_call.1} parent=43 // pred_check_branch
          %383 = sbr.rel (%p381) target = $region52
        $region51: #{tpu_custom_call.1} parent=43 // pred_region
          %v384 = vld [vmem:[%s340] sm:$0xf]
          %v385 = vld [vmem:[%s340 + $0x4] sm:$0xf]
          %v386 = vld [vmem:[%s356] sm:$0xf]
          %v387 = vld [vmem:[%s356 + $0x4] sm:$0xf]
          %v388 = vld [vmem:[%s356 + $0x8] sm:$0xf]
          %v389 = vld [vmem:[%s356 + $0xc] sm:$0xf]
          %v390 = vld [vmem:[%s359] sm:$0x1]
          %v392 = vlaneseq
          %v393 = vshrl.u32 %v392, 7
          %v394 = vsub.s32 0, %v393
          %v395 = vrot.slane %v390, %v394
          %v399 = vunpack.c.l.b16 %v384
          %v400 = vunpack.c.l.b16 %v385
          %v401 = vpack.c.b16 %v400, %v399
          %v406 = vunpack.c.l.b16 %v386
          %v407 = vunpack.c.l.b16 %v387
          %v408 = vunpack.c.l.b16 %v388
          %v409 = vunpack.c.l.b16 %v389
          %v410 = vpack.c.b16 %v407, %v406
          %v411 = vpack.c.b16 %v409, %v408
          %vm414 = vcmask 261120
          %v416 = vsel %vm414, %v401, 0
          %418 = vmatprep.subr.bf16.mxu0 0
          %419 = vmatpush1.bf16.msra.mxu0 %v410
          %420 = vmatprep.subr.bf16.mxu0 0
          %421 = vmatpush1.bf16.msra.mxu0 %v411
          %422 = vmatprep.subr.bf16.mxu0 0
          %423 = vmatpush1.bf16.msra.mxu0 0
          %424 = vmatprep.subr.bf16.mxu0 0
          %425 = vmatpush1.bf16.msra.mxu0 0
          %426 = vmatprep.subr.bf16.mxu0 0
          %427 = vmatpush1.bf16.msra.mxu0 0
          %428 = vmatprep.subr.bf16.mxu0 0
          %429 = vmatpush1.bf16.msra.mxu0 0
          %430 = vmatprep.subr.bf16.mxu0 0
          %431 = vmatpush1.bf16.msra.mxu0 0
          %432 = vmatprep.subr.bf16.mxu0 0
          %433 = vmatpush1.bf16.msra.mxu0 0
          %434 = vmatprep.subr.bf16.mxu0 0
          %435 = vmatpush1.bf16.msra.mxu0 0
          %436 = vmatprep.subr.bf16.mxu0 0
          %437 = vmatpush1.bf16.msra.mxu0 0
          %438 = vmatprep.subr.bf16.mxu0 0
          %439 = vmatpush1.bf16.msra.mxu0 0
          %440 = vmatprep.subr.bf16.mxu0 0
          %441 = vmatpush1.bf16.msra.mxu0 0
          %442 = vmatprep.subr.bf16.mxu0 0
          %443 = vmatpush1.bf16.msra.mxu0 0
          %444 = vmatprep.subr.bf16.mxu0 0
          %445 = vmatpush1.bf16.msra.mxu0 0
          %446 = vmatprep.subr.bf16.mxu0 0
          %447 = vmatpush1.bf16.msra.mxu0 0
          %448 = vmatprep.subr.bf16.mxu0 0
          %449 = vmatpush1.bf16.msra.mxu0 0
          %450 = vmatprep.mubr.bf16.mxu0 0
          %451 = vmatmul.mubr.bf16.gmra.mrb[0].mxu0 %v416
          %v452 = vpop.f32.mrb[0].mxu0
          %v453 = vadd.f32 %v395, %v452
          %v454 = vpop.f32.mrb[0].mxu0
          %v455 = vpop.f32.mrb[0].mxu0
          %v456 = vadd.f32 %v395, %v455
          %v457 = vpop.f32.mrb[0].mxu0
          %458 = vdwg.mxu0
          %v459 = vmul.f32 %v453, 0.5
          %v460 = vmul.f32 %v456, 0.5
          %v461 = vmul.f32 %v453, 0.044715
          %v462 = vmul.f32 %v456, 0.044715
          %v463 = vmul.f32 %v461, %v453
          %v464 = vmul.f32 %v462, %v456
          %v465 = vmul.f32 %v463, %v453
          %v466 = vmul.f32 %v464, %v456
          %v467 = vadd.f32 %v453, %v465
          %v468 = vadd.f32 %v456, %v466
          %v469 = vmul.f32 %v467, 0.7978846
          %v470 = vmul.f32 %v468, 0.7978846
          %v471 = vtanh.pop %v469
          %v472 = vtanh.pop %v470
          %v473 = vadd.f32 %v471, 1.0
          %v474 = vadd.f32 %v472, 1.0
          %v475 = vmul.f32 %v459, %v473
          %v476 = vmul.f32 %v460, %v474
          %v477 = vpack.c.bf16 %v476, %v475
          %v478 = vld [vmem:[%s364] sm:$0xf]
          %v479 = vld [vmem:[%s364 + $0x4] sm:$0xf]
          %v480 = vld [vmem:[%s364 + $0x8] sm:$0xf]
          %v481 = vld [vmem:[%s364 + $0xc] sm:$0xf]
          %v482 = vld [vmem:[%s364 + $0x10] sm:$0xf]
          %v483 = vld [vmem:[%s364 + $0x14] sm:$0xf]
          %v484 = vld [vmem:[%s364 + $0x18] sm:$0xf]
          %v485 = vld [vmem:[%s364 + $0x1c] sm:$0xf]
          %v486 = vld [vmem:[%s364 + $0x20] sm:$0xf]
          %v487 = vld [vmem:[%s364 + $0x24] sm:$0xf]
          %v488 = vld [vmem:[%s364 + $0x28] sm:$0xf]
          %v489 = vld [vmem:[%s364 + $0x2c] sm:$0xf]
          %v490 = vld [vmem:[%s364 + $0x30] sm:$0xf]
          %v491 = vld [vmem:[%s364 + $0x34] sm:$0xf]
          %v492 = vld [vmem:[%s364 + $0x38] sm:$0xf]
          %v493 = vld [vmem:[%s364 + $0x3c] sm:$0xf]
          %v494 = vld [vmem:[%s367] sm:$0x1]
          %v496 = vlaneseq
          %v497 = vshrl.u32 %v496, 7
          %v498 = vsub.s32 0, %v497
          %v499 = vrot.slane %v494, %v498
          %v517 = vunpack.c.l.b16 %v478
          %v518 = vunpack.c.l.b16 %v479
          %v519 = vunpack.c.l.b16 %v480
          %v520 = vunpack.c.l.b16 %v481
          %v521 = vunpack.c.l.b16 %v482
          %v522 = vunpack.c.l.b16 %v483
          %v523 = vunpack.c.l.b16 %v484
          %v524 = vunpack.c.l.b16 %v485
          %v525 = vunpack.c.l.b16 %v486
          %v526 = vunpack.c.l.b16 %v487
          %v527 = vunpack.c.l.b16 %v488
          %v528 = vunpack.c.l.b16 %v489
          %v529 = vunpack.c.l.b16 %v490
          %v530 = vunpack.c.l.b16 %v491
          %v531 = vunpack.c.l.b16 %v492
          %v532 = vunpack.c.l.b16 %v493
          %v533 = vpack.c.b16 %v518, %v517
          %v534 = vpack.c.b16 %v520, %v519
          %v535 = vpack.c.b16 %v522, %v521
          %v536 = vpack.c.b16 %v524, %v523
          %v537 = vpack.c.b16 %v526, %v525
          %v538 = vpack.c.b16 %v528, %v527
          %v539 = vpack.c.b16 %v530, %v529
          %v540 = vpack.c.b16 %v532, %v531
          %549 = vmatprep.subr.bf16.mxu0 0
          %550 = vmatpush1.bf16.msra.mxu0 %v533
          %551 = vmatprep.subr.bf16.mxu0 0
          %552 = vmatpush1.bf16.msra.mxu0 %v534
          %553 = vmatprep.subr.bf16.mxu0 0
          %554 = vmatpush1.bf16.msra.mxu0 %v535
          %555 = vmatprep.subr.bf16.mxu0 0
          %556 = vmatpush1.bf16.msra.mxu0 %v536
          %557 = vmatprep.subr.bf16.mxu0 0
          %558 = vmatpush1.bf16.msra.mxu0 %v537
          %559 = vmatprep.subr.bf16.mxu0 0
          %560 = vmatpush1.bf16.msra.mxu0 %v538
          %561 = vmatprep.subr.bf16.mxu0 0
          %562 = vmatpush1.bf16.msra.mxu0 %v539
          %563 = vmatprep.subr.bf16.mxu0 0
          %564 = vmatpush1.bf16.msra.mxu0 %v540
          %565 = vmatprep.subr.bf16.mxu0 0
          %566 = vmatpush1.bf16.msra.mxu0 0
          %567 = vmatprep.subr.bf16.mxu0 0
          %568 = vmatpush1.bf16.msra.mxu0 0
          %569 = vmatprep.subr.bf16.mxu0 0
          %570 = vmatpush1.bf16.msra.mxu0 0
          %571 = vmatprep.subr.bf16.mxu0 0
          %572 = vmatpush1.bf16.msra.mxu0 0
          %573 = vmatprep.subr.bf16.mxu0 0
          %574 = vmatpush1.bf16.msra.mxu0 0
          %575 = vmatprep.subr.bf16.mxu0 0
          %576 = vmatpush1.bf16.msra.mxu0 0
          %577 = vmatprep.subr.bf16.mxu0 0
          %578 = vmatpush1.bf16.msra.mxu0 0
          %579 = vmatprep.subr.bf16.mxu0 0
          %580 = vmatpush1.bf16.msra.mxu0 0
          %581 = vmatprep.mubr.bf16.mxu0 0
          %582 = vmatmul.mubr.bf16.gmra.mrb[0].mxu0 %v477
          %v583 = vpop.f32.mrb[0].mxu0
          %v584 = vadd.f32 %v499, %v583
          %v585 = vpop.f32.mrb[0].mxu0
          %v586 = vpop.f32.mrb[0].mxu0
          %v587 = vadd.f32 %v499, %v586
          %v588 = vpop.f32.mrb[0].mxu0
          %589 = vdwg.mxu0
          %v590 = vld [vmem:[#allocation4] sm:$0xff]
          %v591 = vld [vmem:[#allocation4 + $0x8] sm:$0xff]
          %v592 = vld [vmem:[%s350] sm:$0xff]
          %v593 = vld [vmem:[%s350 + $0x8] sm:$0xff]
          %595 = vset.pattern.permute.xlu0 0
          %596 = vperm.xlu0 %595, %v592
          %v597 = vpop.permute.xlu0 %596
          %600 = vset.pattern.permute.xlu0 0
          %601 = vperm.xlu0 %600, %v593
          %v602 = vpop.permute.xlu0 %601
          %v604 = vmul.f32 %v597, %v584
          %v605 = vmul.f32 %v602, %v587
          %v606 = vadd.f32 %v590, %v604
          %v607 = vadd.f32 %v591, %v605
          %608 = vst.msk [vmem:[#allocation4] sm:$0xff] %vm414, %v606
          %609 = vst.msk [vmem:[#allocation4 + $0x8] sm:$0xff] %vm414, %v607
        $region52: #{tpu_custom_call.1} parent=43 // pred_fallthru
          _
        // Predicated region
        $region53: #{tpu_custom_call.1} parent=43 // pred_check
          %p610 = pneg %p213
        $region54: #{tpu_custom_call.1} parent=43 // pred_check_branch
          %612 = sbr.rel (%p610) target = $region56
        $region55: #{tpu_custom_call.1} parent=43 // pred_region
          %s613 = smul.u32 2, %s29
          %s615 = ssub.s32 256, 256
          %616 = vsyncadd [#allocation5], %s615
          %s617 = smul.addr %s613, 128
          %s618 = scalar_lea.hbm %s7, %s617
          %s619 = sshll.u32 [#allocation4], 4
          %s620 = int_to_ptr.vmem [resolvable:$true] %s619
          %625 = dma.vmem_to_hbm [thread:$0]  %s620, 256, %s618, [#allocation5], 128, 128, 8
        $region56: #{tpu_custom_call.1} parent=43 // pred_fallthru
          _
        // Predicated region
        $region57: #{tpu_custom_call.1} parent=43 // pred_check
          %p626 = pneg %p213
        $region58: #{tpu_custom_call.1} parent=43 // pred_check_branch
          %628 = sbr.rel (%p626) target = $region60
        $region59: #{tpu_custom_call.1} parent=43 // pred_region
          %629 = dma.done [#allocation5], 256
        $region60: #{tpu_custom_call.1} parent=43 // pred_fallthru
          _
      $region44: #{tpu_custom_call.1} parent=5 // pred_fallthru
        _
      %p630 = scmp.le.s32.totalorder 2, %s20
      // Predicated region
      $region61: #{tpu_custom_call.1} parent=5 // pred_check
        %p631 = pneg %p630
      $region62: #{tpu_custom_call.1} parent=5 // pred_check_branch
        %633 = sbr.rel (%p631) target = $region64
      $region63: #{tpu_custom_call.1} parent=5 // pred_region
        %s634 = ssub.s32 %s20, 2
      $region64: #{tpu_custom_call.1} parent=5 // pred_fallthru
        _
    $region6: #{tpu_custom_call.1} parent=1 // loop_footer
      %s24 = sadd.s32 1, %s20
    $region7: #{tpu_custom_call.1} parent=1 // loop_footer_branch
      %19 = sbr.rel target = $region3
    $region8: #{tpu_custom_call.1} parent=1 // loop_exit
      _
    %635 = vsyncpa [#allocation5], 1
    %s636 = scalar_lea.sflag [#allocation5], 1
    %637 = vsyncpa %s636, 1

</llo_original>
